<compile_context>
chip_gen: v7x
topology: tpu7x:2x2x1
jax: 0.10.0
libtpu: 0.0.40
codegen_flags: <defaults>
</compile_context>

<pallas_src>
import functools

import jax
import jax.numpy as jnp
from jax.experimental import pallas as pl
from jax.experimental.pallas import tpu as pltpu

_MIB = 1024 * 1024


def _round_up(x, m):
    return ((x + m - 1) // m) * m


def _sublane_align(dtype):
    itemsize = jnp.dtype(dtype).itemsize
    return {4: 8, 2: 16, 1: 32}.get(itemsize, 8)


def _vmem_plan():
    """(vmem_limit_bytes, planning budget) derived from physical VMEM."""
    cap = 64 * _MIB  # conservative default (v7x per-TC capacity)
    try:
        info = pltpu.get_tpu_info()
        cap = int(getattr(info, "vmem_capacity_bytes", cap)) or cap
    except Exception:
        pass
    limit = min((cap * 3) // 4, 96 * _MIB)   # leave headroom below physical
    budget = (limit * 4) // 5                # planning budget under the limit
    return limit, budget


def _apply_activation(x, name):
    if name is None or name == "linear":
        return x
    if name == "cos":
        return jnp.cos(x)
    if name == "sin":
        return jnp.sin(x)
    if name == "relu":
        return jnp.maximum(x, 0.0)
    if name == "tanh":
        return jnp.tanh(x)
    raise ValueError(f"unsupported activation: {name}")


# ----------------------------------------------------------------------------
# Kernels
# ----------------------------------------------------------------------------
def _dense_resident_kernel(x_ref, w_ref, b_ref, o_ref, *, activation_name,
                           compute_dtype):
    # x_ref: (tm, d)   w_ref: (d, n_pad) resident   b_ref: (1, n_pad) resident
    # o_ref: (tm, n_pad)
    x = x_ref[...]
    w = w_ref[...]
    if compute_dtype is not None:
        x = x.astype(compute_dtype)
        w = w.astype(compute_dtype)
    acc = jnp.dot(x, w, preferred_element_type=jnp.float32)
    acc = acc + b_ref[...].astype(jnp.float32)
    o_ref[...] = _apply_activation(acc, activation_name).astype(o_ref.dtype)


def _dense_tiled_kernel(x_ref, w_ref, b_ref, o_ref, acc_ref, *,
                        activation_name, compute_dtype):
    # x_ref: (tm, tk)  w_ref: (tk, tn)  b_ref: (1, tn)
    # o_ref: (tm, tn)  acc_ref: (tm, tn) f32 scratch, resident across k.
    k = pl.program_id(2)

    @pl.when(k == 0)
    def _():
        # Seed the accumulator with the (broadcast) bias instead of adding it
        # in the epilogue.
        acc_ref[...] = jnp.broadcast_to(
            b_ref[...].astype(jnp.float32), acc_ref.shape)

    x = x_ref[...]
    w = w_ref[...]
    if compute_dtype is not None:
        x = x.astype(compute_dtype)
        w = w.astype(compute_dtype)
    acc_ref[...] += jnp.dot(x, w, preferred_element_type=jnp.float32)

    @pl.when(k == pl.num_programs(2) - 1)
    def _():
        o_ref[...] = _apply_activation(
            acc_ref[...], activation_name).astype(o_ref.dtype)


# ----------------------------------------------------------------------------
# Wrapper
# ----------------------------------------------------------------------------
def dense_layer(x, kernel, bias, activation_name=None, compute_dtype=None,
                _force_tiled=False):
    """Pallas equivalent of Layer.forward: activation(x @ kernel + bias)."""
    *lead, d = x.shape
    d_in, units = kernel.shape
    assert d_in == d, (d_in, d)
    assert bias.shape == (units,)

    M = 1
    for s in lead:
        M *= s
    M = max(int(M), 1)
    x2d = x.reshape(M, d)
    out_dtype = x.dtype

    align = _sublane_align(x.dtype)
    itemsize = jnp.dtype(x.dtype).itemsize
    vmem_limit, budget = _vmem_plan()

    # Lane-dense N: pad only W / bias (tiny arrays), never X or the rows of out.
    n_pad = _round_up(units, 128)
    w = kernel
    b2d = bias.reshape(1, units)
    if n_pad != units:
        w = jnp.pad(w, ((0, 0), (0, n_pad - units)))
        b2d = jnp.pad(b2d, ((0, 0), (0, n_pad - units)))
    w_itemsize = jnp.dtype(w.dtype).itemsize

    kern_kwargs = dict(activation_name=activation_name,
                      compute_dtype=compute_dtype)

    # ---- fast path: weight + bias resident in VMEM, 1-D grid over rows -----
    w_bytes = d * n_pad * w_itemsize
    bias_bytes = n_pad * jnp.dtype(b2d.dtype).itemsize
    resident_fixed = 2 * w_bytes + 2 * bias_bytes          # double-buffer safe
    per_row_bytes = 2 * (d + n_pad) * itemsize             # X in + out, dbl-buf
    tm_cap = (budget - resident_fixed) // per_row_bytes if budget > resident_fixed else 0

    use_resident = (not _force_tiled) and tm_cap >= min(M, 128)

    if use_resident:
        max_tm = min(int(tm_cap), 2048)
        if M <= max_tm:
            if M >= 1024:
                # Split into 2 row blocks so both v7x TensorCores get work.
                tm = _round_up((M + 1) // 2, align)
            else:
                tm = M                      # single full-extent block (exempt)
        else:
            tm = max((max_tm // align) * align, align)

        grid = (pl.cdiv(M, tm),)
        out2d = pl.pallas_call(
            functools.partial(_dense_resident_kernel, **kern_kwargs),
            out_shape=jax.ShapeDtypeStruct((M, n_pad), out_dtype),
            grid_spec=pltpu.PrefetchScalarGridSpec(
                num_scalar_prefetch=0,
                grid=grid,
                in_specs=[
                    pl.BlockSpec((tm, d), lambda i: (i, 0)),        # X row tile
                    pl.BlockSpec((d, n_pad), lambda i: (0, 0)),     # W resident
                    pl.BlockSpec((1, n_pad), lambda i: (0, 0)),     # bias resident
                ],
                out_specs=pl.BlockSpec((tm, n_pad), lambda i: (i, 0)),
            ),
            compiler_params=pltpu.CompilerParams(
                dimension_semantics=("parallel",),
                vmem_limit_bytes=vmem_limit,
            ),
        )(x2d, w, b2d)
    else:
        # ---- fallback: 3-D grid with f32 accumulator (large weights) -------
        tk = min(512, _round_up(d, 128))
        tn = min(512, n_pad)
        k_pad = _round_up(d, tk)
        if k_pad != d:
            # Reduction-axis garbage would poison valid outputs -> must pad K.
            x2d = jnp.pad(x2d, ((0, 0), (0, k_pad - d)))
            w = jnp.pad(w, ((0, k_pad - d), (0, 0)))

        fixed = 2 * tk * tn * w_itemsize + 2 * tn * 4
        per_row = 2 * tk * itemsize + 2 * tn * itemsize + tn * 4  # X + out + acc
        tm_cap2 = max((budget - fixed) // per_row, align)
        tm = max(min(1024, (int(tm_cap2) // align) * align), align)
        if M < tm:
            tm = M

        grid = (pl.cdiv(M, tm), pl.cdiv(n_pad, tn), k_pad // tk)
        out2d = pl.pallas_call(
            functools.partial(_dense_tiled_kernel, **kern_kwargs),
            out_shape=jax.ShapeDtypeStruct((M, n_pad), out_dtype),
            grid_spec=pltpu.PrefetchScalarGridSpec(
                num_scalar_prefetch=0,
                grid=grid,
                in_specs=[
                    pl.BlockSpec((tm, tk), lambda i, j, k: (i, k)),  # X tile
                    pl.BlockSpec((tk, tn), lambda i, j, k: (k, j)),  # W tile
                    pl.BlockSpec((1, tn), lambda i, j, k: (0, j)),   # bias tile
                ],
                out_specs=pl.BlockSpec((tm, tn), lambda i, j, k: (i, j)),
                scratch_shapes=[pltpu.VMEM((tm, tn), jnp.float32)],
            ),
            compiler_params=pltpu.CompilerParams(
                dimension_semantics=("parallel", "parallel", "arbitrary"),
                vmem_limit_bytes=vmem_limit,
            ),
        )(x2d, w, b2d)

    if n_pad != units:
        out2d = out2d[:, :units]
    return out2d.reshape(*lead, units)


if __name__ == "__main__":
    # Small shapes consistent with the module's docstring:
    #   X: input_batch_shape x n x d  -> (2, 8, 32), units = 64
    batch, n, d, units = 2, 8, 32, 64
    key = jax.random.PRNGKey(0)
    kx, kw, kb = jax.random.split(key, 3)

    x = jax.random.normal(kx, (batch, n, d), dtype=jnp.float32)
    # Deterministic "initializers" (kernel_initializer / bias_initializer)
    kernel = jax.random.normal(kw, (d, units), dtype=jnp.float32) * 0.1
    bias = jax.random.uniform(kb, (units,), dtype=jnp.float32)

    # RandomFourierBasis typically passes cos as the activation.
    out = jax.block_until_ready(dense_layer(x, kernel, bias, activation_name="cos"))
    ref = jnp.cos(jnp.matmul(x, kernel) + bias)
    assert out.shape == (batch, n, units)
    assert jnp.allclose(out, ref, atol=1e-5, rtol=1e-5), "cos mismatch vs reference"

    # Linear (activation=None) path.
    out_lin = jax.block_until_ready(dense_layer(x, kernel, bias, activation_name=None))
    ref_lin = jnp.matmul(x, kernel) + bias
    assert jnp.allclose(out_lin, ref_lin, atol=1e-5, rtol=1e-5), "linear mismatch"

    # Larger / non-aligned shape exercising partial M-edge blocks + N padding
    # (M = 3*200 = 600 rows, d = 96, units = 200).
    x2 = jax.random.normal(kx, (3, 200, 96), dtype=jnp.float32)
    k2 = jax.random.normal(kw, (96, 200), dtype=jnp.float32) * 0.05
    b2 = jax.random.uniform(kb, (200,), dtype=jnp.float32)
    out2 = jax.block_until_ready(dense_layer(x2, k2, b2, activation_name="cos"))
    ref2 = jnp.cos(jnp.matmul(x2, k2) + b2)
    assert out2.shape == (3, 200, 200)
    assert jnp.allclose(out2, ref2, atol=1e-4, rtol=1e-4), "resident-path mismatch"

    # Exercise the large-weight fallback path (3-D grid, accumulator) at small
    # shapes by forcing it.
    out3 = jax.block_until_ready(
        dense_layer(x2, k2, b2, activation_name="cos", _force_tiled=True))
    assert jnp.allclose(out3, ref2, atol=1e-4, rtol=1e-4), "tiled-path mismatch"

    print("KERNEL_OK")
</pallas_src>

<mosaic_0001>
module attributes {stable_mosaic.version = 11 : i64} {
  func.func @_dense_resident_kernel(%arg0: i32, %arg1: memref<16x32xf32, #tpu.memory_space<vmem>>, %arg2: memref<32x128xf32, #tpu.memory_space<vmem>>, %arg3: memref<1x128xf32, #tpu.memory_space<vmem>>, %arg4: memref<16x128xf32, #tpu.memory_space<vmem>>) attributes {dimension_semantics = [#tpu.dimension_semantics<parallel>], iteration_bounds = array<i64: 1>, scalar_prefetch = 0 : i64, scratch_operands = 0 : i64, tpu.core_type = #tpu.core_type<tc>, window_params = [{transform_indices = @transform_0, window_bounds = array<i64: 16, 32>}, {pipeline_mode = #tpu.pipeline_mode<synchronous>, transform_indices = @transform_1, window_bounds = array<i64: 32, 128>}, {pipeline_mode = #tpu.pipeline_mode<synchronous>, transform_indices = @transform_2, window_bounds = array<i64: 1, 128>}, {transform_indices = @transform_3, window_bounds = array<i64: 16, 128>}]} {
    %c0 = arith.constant 0 : index
    %c0_0 = arith.constant 0 : index
    %0 = vector.load %arg1[%c0, %c0_0] : memref<16x32xf32, #tpu.memory_space<vmem>>, vector<16x32xf32>
    %c0_1 = arith.constant 0 : index
    %c0_2 = arith.constant 0 : index
    %1 = vector.load %arg2[%c0_1, %c0_2] : memref<32x128xf32, #tpu.memory_space<vmem>>, vector<32x128xf32>
    %cst = arith.constant dense<0.000000e+00> : vector<16x128xf32>
    %2 = tpu.matmul %0, %1, %cst {dimension_numbers = #tpu.dot_dimension_numbers<[1], [0], [0], [1], [0, 0, 1, 1], [], []>} : vector<16x32xf32>, vector<32x128xf32>, vector<16x128xf32> -> vector<16x128xf32>
    %c0_3 = arith.constant 0 : index
    %c0_4 = arith.constant 0 : index
    %3 = vector.load %arg3[%c0_3, %c0_4] : memref<1x128xf32, #tpu.memory_space<vmem>>, vector<1x128xf32>
    %4 = vector.broadcast %3 : vector<1x128xf32> to vector<16x128xf32>
    %5 = arith.addf %2, %4 : vector<16x128xf32>
    %6 = math.cos %5 : vector<16x128xf32>
    %c0_5 = arith.constant 0 : index
    %c0_6 = arith.constant 0 : index
    %7 = vector.load %arg4[%c0_5, %c0_6] : memref<16x128xf32, #tpu.memory_space<vmem>>, vector<16x128xf32>
    tpu.vector_store %arg4[%c0_5, %c0_6], %6 {strides = array<i32>} : memref<16x128xf32, #tpu.memory_space<vmem>>, vector<16x128xf32>,
    return
  }
  func.func @transform_0(%arg0: i32) -> (i32, i32) {
    %c0_i32 = arith.constant 0 : i32
    %c0_i32_0 = arith.constant 0 : i32
    return %arg0, %c0_i32 : i32, i32
  }
  func.func @transform_1(%arg0: i32) -> (i32, i32) {
    %c0_i32 = arith.constant 0 : i32
    %c0_i32_0 = arith.constant 0 : i32
    %c0_i32_1 = arith.constant 0 : i32
    return %c0_i32, %c0_i32_0 : i32, i32
  }
  func.func @transform_2(%arg0: i32) -> (i32, i32) {
    %c0_i32 = arith.constant 0 : i32
    %c0_i32_0 = arith.constant 0 : i32
    %c0_i32_1 = arith.constant 0 : i32
    return %c0_i32, %c0_i32_0 : i32, i32
  }
  func.func @transform_3(%arg0: i32) -> (i32, i32) {
    %c0_i32 = arith.constant 0 : i32
    %c0_i32_0 = arith.constant 0 : i32
    return %arg0, %c0_i32 : i32, i32
  }
}

</mosaic_0001>

<llo_original>
// kernel: tpu_custom_call.1
$region0: #{tpu_custom_call.1}
  #allocation0 [shape = 'u32[]', space=smem, size = 0x4, offset = 0x4, fixed_abs, tag = 'smem constant byte address 0x4 - core index']
  #allocation1 [shape = 'u32[144,128]{1,0:T(1,128)}', space=vmem, size = 0x12000, scoped, tag = 'internal scratch']
  %s0 = inlined_call_operand.hbm [shape: f32[16,32], index: 0, kind: input, shape index: {}]
  %s1 = inlined_call_operand.hbm [shape: f32[32,128], index: 1, kind: input, shape index: {}]
  %s2 = inlined_call_operand.vmem [shape: f32[1,128], index: 2, kind: input, shape index: {}]
  %s3 = inlined_call_operand.hbm [shape: f32[16,128], index: 3, kind: output, shape index: {}]
  %s4 = sld [smem:[#allocation0]]
  $region30: #{tpu_custom_call.1} parent=0
    _
  %s6 = ssub.s32 1, %s4
  %s7 = scalar_select 0, %s6, %s4
  $region1: #{tpu_custom_call.1} parent=0
    #allocation2 [shape = 'u8[8192]{0}', space=vmem, size = 0x2000, scoped, tag = 'input window, operand 0, single buffered']
    #allocation3 [shape = 's32[1]{0}', space=sflag, size = 0x4, scoped, tag = 'scoped memory for tpu_custom_call.1']
    #allocation4 [shape = 's32[1]{0}', space=sflag, size = 0x4, scoped, tag = 'scoped memory for tpu_custom_call.1']
    #allocation5 [shape = 'u8[16384]{0}', space=vmem, size = 0x4000, scoped, tag = 'input window, operand 1, single buffered']
    #allocation6 [shape = 's32[1]{0}', space=sflag, size = 0x4, scoped, tag = 'scoped memory for tpu_custom_call.1']
    #allocation7 [shape = 'u8[8192]{0}', space=vmem, size = 0x2000, scoped, tag = 'output window, operand 0, single buffered']
    %8 = vsyncpa [#allocation3], 0
    %9 = vsyncpa [#allocation6], 0
    %10 = vsyncpa [#allocation4], 0
    // Predicated region
    $region2: #{tpu_custom_call.1} parent=1 // pred_check
      _
    $region3: #{tpu_custom_call.1} parent=1 // pred_check_branch
      %12 = sbr.rel (0) target = $region5
    $region4: #{tpu_custom_call.1} parent=1 // pred_region
      %s14 = ssub.s32 256, 256
      %15 = vsyncadd [#allocation3], %s14
      %s16 = sshll.u32 [#allocation2], 4
      %s17 = int_to_ptr.vmem [resolvable:$true] %s16
      %22 = dma.hbm_to_vmem [thread:$0]  %s0, 256, %s17, [#allocation3], 128, 128, 8
    $region5: #{tpu_custom_call.1} parent=1 // pred_fallthru
      _
    // Predicated region
    $region6: #{tpu_custom_call.1} parent=1 // pred_check
      _
    $region7: #{tpu_custom_call.1} parent=1 // pred_check_branch
      %24 = sbr.rel (0) target = $region9
    $region8: #{tpu_custom_call.1} parent=1 // pred_region
      %s26 = ssub.s32 512, 512
      %27 = vsyncadd [#allocation6], %s26
      %s28 = sshll.u32 [#allocation5], 4
      %s29 = int_to_ptr.vmem [resolvable:$true] %s28
      %34 = dma.hbm_to_vmem [thread:$0]  %s1, 512, %s29, [#allocation6], 128, 128, 8
    $region9: #{tpu_custom_call.1} parent=1 // pred_fallthru
      _
    // Predicated region
    $region10: #{tpu_custom_call.1} parent=1 // pred_check
      _
    $region11: #{tpu_custom_call.1} parent=1 // pred_check_branch
      %36 = sbr.rel (0) target = $region13
    $region12: #{tpu_custom_call.1} parent=1 // pred_region
      _
    $region13: #{tpu_custom_call.1} parent=1 // pred_fallthru
      _
    // Predicated region
    $region14: #{tpu_custom_call.1} parent=1 // pred_check
      _
    $region15: #{tpu_custom_call.1} parent=1 // pred_check_branch
      %38 = sbr.rel (0) target = $region17
    $region16: #{tpu_custom_call.1} parent=1 // pred_region
      %39 = dma.done [#allocation3], 256
    $region17: #{tpu_custom_call.1} parent=1 // pred_fallthru
      _
    // Predicated region
    $region18: #{tpu_custom_call.1} parent=1 // pred_check
      _
    $region19: #{tpu_custom_call.1} parent=1 // pred_check_branch
      %41 = sbr.rel (0) target = $region21
    $region20: #{tpu_custom_call.1} parent=1 // pred_region
      %42 = dma.done [#allocation6], 512
    $region21: #{tpu_custom_call.1} parent=1 // pred_fallthru
      _
    %v43 = vld [vmem:[#allocation2] sm:$0xff]
    %v44 = vld [vmem:[#allocation2 + $0x8] sm:$0xff]
    %v45 = vld [vmem:[#allocation5] sm:$0xff]
    %v46 = vld [vmem:[#allocation5 + $0x8] sm:$0xff]
    %v47 = vld [vmem:[#allocation5 + $0x10] sm:$0xff]
    %v48 = vld [vmem:[#allocation5 + $0x18] sm:$0xff]
    %v49 = vld [vmem:[%s2] sm:$0x1]
    %v51 = vlaneseq
    %v52 = vshrl.u32 %v51, 7
    %v53 = vsub.s32 0, %v52
    %v54 = vrot.slane %v49, %v53
    %vm56 = vcmask 261120
    %v58 = vsel %vm56, %v43, 0
    %v61 = vsel %vm56, %v44, 0
    %63 = vmatprep.subr.mxu0 0.0
    %64 = vmatpush1.msra.mxu0 %v45
    %65 = vmatprep.subr.mxu0 0.0
    %66 = vmatpush1.msra.mxu0 %v46
    %67 = vmatprep.subr.mxu0 0.0
    %68 = vmatpush1.msra.mxu0 %v47
    %69 = vmatprep.subr.mxu0 0.0
    %70 = vmatpush1.msra.mxu0 %v48
    %71 = vmatprep.subr.mxu0 0.0
    %72 = vmatpush1.msra.mxu0 0.0
    %73 = vmatprep.subr.mxu0 0.0
    %74 = vmatpush1.msra.mxu0 0.0
    %75 = vmatprep.subr.mxu0 0.0
    %76 = vmatpush1.msra.mxu0 0.0
    %77 = vmatprep.subr.mxu0 0.0
    %78 = vmatpush1.msra.mxu0 0.0
    %79 = vmatprep.subr.mxu0 0.0
    %80 = vmatpush1.msra.mxu0 0.0
    %81 = vmatprep.subr.mxu0 0.0
    %82 = vmatpush1.msra.mxu0 0.0
    %83 = vmatprep.subr.mxu0 0.0
    %84 = vmatpush1.msra.mxu0 0.0
    %85 = vmatprep.subr.mxu0 0.0
    %86 = vmatpush1.msra.mxu0 0.0
    %87 = vmatprep.subr.mxu0 0.0
    %88 = vmatpush1.msra.mxu0 0.0
    %89 = vmatprep.subr.mxu0 0.0
    %90 = vmatpush1.msra.mxu0 0.0
    %91 = vmatprep.subr.mxu0 0.0
    %92 = vmatpush1.msra.mxu0 0.0
    %93 = vmatprep.subr.mxu0 0.0
    %94 = vmatpush1.msra.mxu0 0.0
    %95 = vmatprep.subr.mxu0 0.0
    %96 = vmatpush1.msra.mxu0 0.0
    %97 = vmatprep.subr.mxu0 0.0
    %98 = vmatpush1.msra.mxu0 0.0
    %99 = vmatprep.subr.mxu0 0.0
    %100 = vmatpush1.msra.mxu0 0.0
    %101 = vmatprep.subr.mxu0 0.0
    %102 = vmatpush1.msra.mxu0 0.0
    %103 = vmatprep.subr.mxu0 0.0
    %104 = vmatpush1.msra.mxu0 0.0
    %105 = vmatprep.subr.mxu0 0.0
    %106 = vmatpush1.msra.mxu0 0.0
    %107 = vmatprep.subr.mxu0 0.0
    %108 = vmatpush1.msra.mxu0 0.0
    %109 = vmatprep.subr.mxu0 0.0
    %110 = vmatpush1.msra.mxu0 0.0
    %111 = vmatprep.subr.mxu0 0.0
    %112 = vmatpush1.msra.mxu0 0.0
    %113 = vmatprep.subr.mxu0 0.0
    %114 = vmatpush1.msra.mxu0 0.0
    %115 = vmatprep.subr.mxu0 0.0
    %116 = vmatpush1.msra.mxu0 0.0
    %117 = vmatprep.subr.mxu0 0.0
    %118 = vmatpush1.msra.mxu0 0.0
    %119 = vmatprep.subr.mxu0 0.0
    %120 = vmatpush1.msra.mxu0 0.0
    %121 = vmatprep.subr.mxu0 0.0
    %122 = vmatpush1.msra.mxu0 0.0
    %123 = vmatprep.subr.mxu0 0.0
    %124 = vmatpush1.msra.mxu0 0.0
    %125 = vmatprep.subr.mxu0 0.0
    %126 = vmatpush1.msra.mxu0 0.0
    %127 = vmatprep.mubr.f32.mxu0 0.0
    %128 = vmatmul.mubr.f32.gmra.mrb[0].mxu0 %v58
    %v129 = vpop.f32.mrb[0].mxu0
    %v130 = vadd.f32 %v54, %v129
    %v131 = vpop.f32.mrb[0].mxu0
    %132 = vmatprep.mubr.f32.mxu0 0.0
    %133 = vmatmul.mubr.f32.gmra.mrb[0].mxu0 %v61
    %v134 = vpop.f32.mrb[0].mxu0
    %v135 = vadd.f32 %v54, %v134
    %v136 = vpop.f32.mrb[0].mxu0
    %137 = vdwg.mxu0
    %v138 = vand.u32 2147483647, %v130
    %vm139 = vcmp.le.f32.partialorder %v138, 0.7853982
    %vm140 = vcmp.lt.s32.totalorder %v130, 0
    %v141 = vand.u32 %v130, 2139095040
    %v142 = vshrl.u32 %v141, 23
    %v143 = vsub.s32 %v142, 127
    %v144 = vand.u32 2147483647, %v130
    %v145 = vand.u32 %v144, 8388607
    %v146 = vor.u32 %v145, 8388608
    %v147 = vsub.s32 0, %v146
    %v148 = vadd.s32 %v143, 1
    %vm149 = vcmp.gt.s32.totalorder %v148, 0
    %v150 = vsel %vm149, %v148, 0
    %v151 = vshrl.u32 %v150, 5
    %v152 = vand.u32 %v150, 31
    %v153 = vsub.s32 32, %v152
    %v154 = vshrl.u32 683565275, %v153
    %v155 = vshll.u32 683565275, %v152
    %v156 = vshrl.u32 2475754826, %v153
    %v157 = vor.u32 %v155, %v156
    %v158 = vshll.u32 2475754826, %v152
    %v159 = vshrl.u32 2131351028, %v153
    %v160 = vor.u32 %v158, %v159
    %v161 = vshll.u32 2131351028, %v152
    %v162 = vshrl.u32 2102212464, %v153
    %v163 = vor.u32 %v161, %v162
    %v164 = vshll.u32 2102212464, %v152
    %v165 = vshrl.u32 920167782, %v153
    %v166 = vor.u32 %v164, %v165
    %v167 = vshll.u32 920167782, %v152
    %v168 = vshrl.u32 1326507024, %v153
    %v169 = vor.u32 %v167, %v168
    %vm170 = vcmp.lt.s32.totalorder %v151, 1
    %vm171 = vcmp.lt.s32.totalorder %v151, 2
    %vm172 = vcmp.lt.s32.totalorder %v151, 3
    %vm173 = vcmp.lt.s32.totalorder %v151, 4
    %v174 = vsel %vm170, %v154, %v157
    %v175 = vsel %vm173, %v163, 2102212464
    %v176 = vsel %vm172, %v160, %v175
    %v177 = vsel %vm171, %v174, %v176
    %v178 = vsel %vm170, %v157, %v160
    %v179 = vsel %vm173, %v166, 920167782
    %v180 = vsel %vm172, %v163, %v179
    %v181 = vsel %vm171, %v178, %v180
    %v182 = vsel %vm170, %v160, %v163
    %v183 = vsel %vm173, %v169, 1326507024
    %v184 = vsel %vm172, %v166, %v183
    %v185 = vsel %vm171, %v182, %v184
    %v186 = vshll.u32 %v146, 8
    %v187 = vmul.u32.u64.compose %v186, %v185
    %v188 = vextract.low.u32 %v187
    %v189 = vextract.high.u32 %v187
    %v190 = vmul.u32.u64.compose %v186, %v181
    %v191 = vextract.low.u32 %v190
    %v192 = vextract.high.u32 %v190
    %v193 = vmul.u32 %v186, %v177
    %v194 = vadd.s32 %v189, %v191
    %vm195 = vc.u32 %v189, %v191
    %v196 = vadd.s32 %v192, 1
    %v197 = vsel %vm195, %v196, %v192
    %v198 = vadd.s32 %v193, %v197
    %v199 = vadd.s32 %v198, 536870912
    %v200 = vshrl.u32 %v199, 30
    %v201 = vshll.u32 %v200, 30
    %v202 = vsub.s32 %v198, %v201
    %vm203 = vcmp.lt.s32.totalorder %v202, 0
    %v204 = vsub.s32 0, %v202
    %v205 = vsel %vm203, %v204, %v202
    %v206 = vclz %v205
    %v207 = vsub.s32 %v206, 2
    %vm208 = vcmp.gt.s32.totalorder 0, %v207
    %v209 = vsel %vm208, 0, %v207
    %v210 = vsub.s32 32, %v209
    %v211 = vshll.u32 %v202, %v209
    %v212 = vshrl.u32 %v194, %v210
    %v213 = vor.u32 %v211, %v212
    %v214 = vsub.s32 4294967266, %v209
    %v215 = vadd.s32 %v214, 127
    %v216 = vshll.u32 %v215, 23
    %v217 = vor.u32 4788187, %v216
    %v218 = vand.u32 2147483647, %v217
    %v220 = vcvt.s32.f32 %v213
    %v221 = vmul.f32 %v220, %v218
    %v222 = vxor.u32 %v221, 2147483648
    %v223 = vsel %vm140, %v222, %v221
    %v224 = vsub.s32 4, %v200
    %v225 = vsel %vm140, %v224, %v200
    %v226 = vsel %vm139, %v130, %v223
    %v227 = vsel %vm139, 0, %v225
    %v228 = vcosq.f32.pop %v226
    %v229 = vsinq.f32.pop %v226
    %vm230 = vweird.f32 %v130
    %v231 = vand.u32 %v227, 3
    %vm232 = vcmp.lt.s32.totalorder %v231, 2
    %vm233 = vcmp.eq.s32.totalorder %v231, 0
    %v234 = vxor.u32 %v229, 2147483648
    %v235 = vsel %vm233, %v228, %v234
    %vm236 = vcmp.eq.s32.totalorder %v231, 2
    %v237 = vxor.u32 %v228, 2147483648
    %v238 = vsel %vm236, %v237, %v229
    %v239 = vsel %vm232, %v235, %v238
    %v240 = vsel %vm230, nan, %v239
    %v241 = vand.u32 2147483647, %v135
    %vm242 = vcmp.le.f32.partialorder %v241, 0.7853982
    %vm243 = vcmp.lt.s32.totalorder %v135, 0
    %v244 = vand.u32 %v135, 2139095040
    %v245 = vshrl.u32 %v244, 23
    %v246 = vsub.s32 %v245, 127
    %v247 = vand.u32 2147483647, %v135
    %v248 = vand.u32 %v247, 8388607
    %v249 = vor.u32 %v248, 8388608
    %v250 = vsub.s32 0, %v249
    %v251 = vadd.s32 %v246, 1
    %vm252 = vcmp.gt.s32.totalorder %v251, 0
    %v253 = vsel %vm252, %v251, 0
    %v254 = vshrl.u32 %v253, 5
    %v255 = vand.u32 %v253, 31
    %v256 = vsub.s32 32, %v255
    %v257 = vshrl.u32 683565275, %v256
    %v258 = vshll.u32 683565275, %v255
    %v259 = vshrl.u32 2475754826, %v256
    %v260 = vor.u32 %v258, %v259
    %v261 = vshll.u32 2475754826, %v255
    %v262 = vshrl.u32 2131351028, %v256
    %v263 = vor.u32 %v261, %v262
    %v264 = vshll.u32 2131351028, %v255
    %v265 = vshrl.u32 2102212464, %v256
    %v266 = vor.u32 %v264, %v265
    %v267 = vshll.u32 2102212464, %v255
    %v268 = vshrl.u32 920167782, %v256
    %v269 = vor.u32 %v267, %v268
    %v270 = vshll.u32 920167782, %v255
    %v271 = vshrl.u32 1326507024, %v256
    %v272 = vor.u32 %v270, %v271
    %vm273 = vcmp.lt.s32.totalorder %v254, 1
    %vm274 = vcmp.lt.s32.totalorder %v254, 2
    %vm275 = vcmp.lt.s32.totalorder %v254, 3
    %vm276 = vcmp.lt.s32.totalorder %v254, 4
    %v277 = vsel %vm273, %v257, %v260
    %v278 = vsel %vm276, %v266, 2102212464
    %v279 = vsel %vm275, %v263, %v278
    %v280 = vsel %vm274, %v277, %v279
    %v281 = vsel %vm273, %v260, %v263
    %v282 = vsel %vm276, %v269, 920167782
    %v283 = vsel %vm275, %v266, %v282
    %v284 = vsel %vm274, %v281, %v283
    %v285 = vsel %vm273, %v263, %v266
    %v286 = vsel %vm276, %v272, 1326507024
    %v287 = vsel %vm275, %v269, %v286
    %v288 = vsel %vm274, %v285, %v287
    %v289 = vshll.u32 %v249, 8
    %v290 = vmul.u32.u64.compose %v289, %v288
    %v291 = vextract.low.u32 %v290
    %v292 = vextract.high.u32 %v290
    %v293 = vmul.u32.u64.compose %v289, %v284
    %v294 = vextract.low.u32 %v293
    %v295 = vextract.high.u32 %v293
    %v296 = vmul.u32 %v289, %v280
    %v297 = vadd.s32 %v292, %v294
    %vm298 = vc.u32 %v292, %v294
    %v299 = vadd.s32 %v295, 1
    %v300 = vsel %vm298, %v299, %v295
    %v301 = vadd.s32 %v296, %v300
    %v302 = vadd.s32 %v301, 536870912
    %v303 = vshrl.u32 %v302, 30
    %v304 = vshll.u32 %v303, 30
    %v305 = vsub.s32 %v301, %v304
    %vm306 = vcmp.lt.s32.totalorder %v305, 0
    %v307 = vsub.s32 0, %v305
    %v308 = vsel %vm306, %v307, %v305
    %v309 = vclz %v308
    %v310 = vsub.s32 %v309, 2
    %vm311 = vcmp.gt.s32.totalorder 0, %v310
    %v312 = vsel %vm311, 0, %v310
    %v313 = vsub.s32 32, %v312
    %v314 = vshll.u32 %v305, %v312
    %v315 = vshrl.u32 %v297, %v313
    %v316 = vor.u32 %v314, %v315
    %v317 = vsub.s32 4294967266, %v312
    %v318 = vadd.s32 %v317, 127
    %v319 = vshll.u32 %v318, 23
    %v320 = vor.u32 4788187, %v319
    %v321 = vand.u32 2147483647, %v320
    %v323 = vcvt.s32.f32 %v316
    %v324 = vmul.f32 %v323, %v321
    %v325 = vxor.u32 %v324, 2147483648
    %v326 = vsel %vm243, %v325, %v324
    %v327 = vsub.s32 4, %v303
    %v328 = vsel %vm243, %v327, %v303
    %v329 = vsel %vm242, %v135, %v326
    %v330 = vsel %vm242, 0, %v328
    %v331 = vcosq.f32.pop %v329
    %v332 = vsinq.f32.pop %v329
    %vm333 = vweird.f32 %v135
    %v334 = vand.u32 %v330, 3
    %vm335 = vcmp.lt.s32.totalorder %v334, 2
    %vm336 = vcmp.eq.s32.totalorder %v334, 0
    %v337 = vxor.u32 %v332, 2147483648
    %v338 = vsel %vm336, %v331, %v337
    %vm339 = vcmp.eq.s32.totalorder %v334, 2
    %v340 = vxor.u32 %v331, 2147483648
    %v341 = vsel %vm339, %v340, %v332
    %v342 = vsel %vm335, %v338, %v341
    %v343 = vsel %vm333, nan, %v342
    %344 = vst [vmem:[#allocation7] sm:$0xff] %v240
    %345 = vst [vmem:[#allocation7 + $0x8] sm:$0xff] %v343
    // Predicated region
    $region22: #{tpu_custom_call.1} parent=1 // pred_check
      _
    $region23: #{tpu_custom_call.1} parent=1 // pred_check_branch
      %347 = sbr.rel (0) target = $region25
    $region24: #{tpu_custom_call.1} parent=1 // pred_region
      %s349 = ssub.s32 256, 256
      %350 = vsyncadd [#allocation4], %s349
      %s351 = sshll.u32 [#allocation7], 4
      %s352 = int_to_ptr.vmem [resolvable:$true] %s351
      %357 = dma.vmem_to_hbm [thread:$0]  %s352, 256, %s3, [#allocation4], 128, 128, 8
    $region25: #{tpu_custom_call.1} parent=1 // pred_fallthru
      _
    // Predicated region
    $region26: #{tpu_custom_call.1} parent=1 // pred_check
      _
    $region27: #{tpu_custom_call.1} parent=1 // pred_check_branch
      %359 = sbr.rel (0) target = $region29
    $region28: #{tpu_custom_call.1} parent=1 // pred_region
      %360 = dma.done [#allocation4], 256
    $region29: #{tpu_custom_call.1} parent=1 // pred_fallthru
      _
    %361 = vsyncpa [#allocation3], 1
    %362 = vsyncpa [#allocation6], 1
    %363 = vsyncpa [#allocation4], 1

</llo_original>
